<compile_context>
chip_gen: v7x
topology: tpu7x:2x2x1
jax: 0.10.0
libtpu: 0.0.40
codegen_flags: <defaults>
</compile_context>

<pallas_src>
import jax
import jax.numpy as jnp
import numpy as np
from jax.experimental import pallas as pl
from jax.experimental.pallas import tpu as pltpu

_BOXES_PER_ROW = 512                 # boxes per padded row
_ROW_LANES = 4 * _BOXES_PER_ROW      # 2048 interleaved lanes (l,t,r,b per box)
_MAX_ROWS = 512                      # max sublane rows per grid step
                                     # -> up to 512*2048 = 1M lanes / 4 MiB f32 per input block


def _iou_loss_kernel(pred_ref, target_ref, out_ref):
    # pred/target blocks: (TR, 2048) in native dtype, boxes interleaved along
    # lanes: lane 4j+0 = l, 4j+1 = t, 4j+2 = r, 4j+3 = b of box j.
    p = pred_ref[...].astype(jnp.float32)
    t = target_ref[...].astype(jnp.float32)
    m = jnp.minimum(p, t)            # per-component mins, still interleaved

    # s[i] = x[i] + x[i-2]  ->  (r + l) at lanes ==2, (b + t) at lanes ==3 (mod 4)
    def _pair_sum(x):
        return x + pltpu.roll(x, shift=2, axis=1)

    # area[i] = s[i] * s[i-1]  ->  (b + t) * (r + l) at lanes ==3 (mod 4)
    def _box_area(x):
        s = _pair_sum(x)
        return s * pltpu.roll(s, shift=1, axis=1)

    inter = _box_area(m)
    union = _box_area(p) + _box_area(t) - inter      # valid at lanes ==3 (mod 4)

    # -log(inter / (union+eps)) == log(union+eps) - log(inter)  (positive boxes).
    # Lanes !=3 (mod 4) hold garbage (possibly NaN/-inf after the log); the
    # wrapper never reads them.
    loss = jnp.log(union + 1e-6) - jnp.log(inter)
    out_ref[...] = loss.astype(out_ref.dtype)


def _round_up(x, m):
    return -(-x // m) * m


def _plan(n_boxes):
    """Padded row count (multiple of 8) and row tile TR with rows % TR == 0."""
    rows = _round_up(max(1, -(-n_boxes // _BOXES_PER_ROW)), 8)
    if rows <= 8:
        return rows, rows                       # tiny input: single step
    if rows <= 2 * _MAX_ROWS:
        rows = _round_up(rows, 16)
        return rows, rows // 2                  # exactly 2 steps -> both v7x TCs busy
    tr = _MAX_ROWS
    return _round_up(rows, tr), tr


@jax.jit
def iou_loss(pred, target):
    """Pallas implementation of IoULoss.forward.

    pred, target: arrays of shape (..., 4) holding (l, t, r, b) distances.
    returns: array of shape pred.shape[:-1] with -log(IoU) per location.
    """
    assert pred.shape == target.shape and pred.shape[-1] == 4
    lead_shape = pred.shape[:-1]
    n = int(np.prod(lead_shape)) if lead_shape else 1

    if not jnp.issubdtype(pred.dtype, jnp.floating):
        pred = pred.astype(jnp.float32)
        target = target.astype(jnp.float32)
    out_dtype = pred.dtype                       # native float dtype end to end

    rows, tr = _plan(n)
    n_pad = rows * _BOXES_PER_ROW

    def to_rows(x):
        # Contiguous flatten (no transpose!): [l0,t0,r0,b0, l1,t1,r1,b1, ...]
        x = x.reshape(-1)
        if n_pad != n:
            # Pad with 1.0 so padded boxes stay finite (sliced off afterwards).
            x = jnp.pad(x, (0, (n_pad - n) * 4), constant_values=1.0)
        return x.reshape(rows, _ROW_LANES)

    pred_r = to_rows(pred)
    target_r = to_rows(target)

    out = pl.pallas_call(
        _iou_loss_kernel,
        out_shape=jax.ShapeDtypeStruct((rows, _ROW_LANES), out_dtype),
        grid_spec=pltpu.PrefetchScalarGridSpec(
            num_scalar_prefetch=0,
            grid=(rows // tr,),
            in_specs=[
                pl.BlockSpec((tr, _ROW_LANES), lambda i: (i, 0)),
                pl.BlockSpec((tr, _ROW_LANES), lambda i: (i, 0)),
            ],
            out_specs=pl.BlockSpec((tr, _ROW_LANES), lambda i: (i, 0)),
        ),
        compiler_params=pltpu.CompilerParams(
            dimension_semantics=("parallel",),
            vmem_limit_bytes=48 * 1024 * 1024,
        ),
    )(pred_r, target_r)

    # Loss of box k lives at flat position 4*k + 3 (lane ==3 within its group).
    out = out.reshape(-1, 4)[:n, 3]
    return out.reshape(lead_shape)


def _iou_loss_ref(pred, target):
    """Pure-JAX reference mirroring the PyTorch forward exactly."""
    p_l, p_t, p_r, p_b = [pred[..., i] for i in range(4)]
    t_l, t_t, t_r, t_b = [target[..., i] for i in range(4)]
    intersection = (jnp.minimum(p_r, t_r) + jnp.minimum(p_l, t_l)) * (
        jnp.minimum(p_b, t_b) + jnp.minimum(p_t, t_t)
    )
    pred_area = (p_r + p_l) * (p_b + p_t)
    target_area = (t_r + t_l) * (t_b + t_t)
    union = pred_area + target_area - intersection
    iou = intersection / (union + 1e-6)
    return -1.0 * jnp.log(iou)


if __name__ == "__main__":
    key = jax.random.PRNGKey(0)
    k1, k2 = jax.random.split(key)

    # FCOS-style regression targets: batch=2, 32x32 feature locations, 4 distances.
    shape = (2, 32, 32, 4)
    pred = jax.random.uniform(k1, shape, dtype=jnp.float32) * 5.0 + 0.1
    target = jax.random.uniform(k2, shape, dtype=jnp.float32) * 5.0 + 0.1

    out = iou_loss(pred, target)
    jax.block_until_ready(out)
    ref = _iou_loss_ref(pred, target)
    np.testing.assert_allclose(np.asarray(out), np.asarray(ref), rtol=1e-5, atol=1e-5)

    # Ragged leading size exercises the padding path.
    shape2 = (3, 17, 23, 4)
    pred2 = jax.random.uniform(k1, shape2, dtype=jnp.float32) * 5.0 + 0.1
    target2 = jax.random.uniform(k2, shape2, dtype=jnp.float32) * 5.0 + 0.1
    out2 = iou_loss(pred2, target2)
    jax.block_until_ready(out2)
    ref2 = _iou_loss_ref(pred2, target2)
    np.testing.assert_allclose(np.asarray(out2), np.asarray(ref2), rtol=1e-5, atol=1e-5)

    # bf16 inputs stay bf16 over HBM in AND out (native-dtype output store).
    pred_bf = pred.astype(jnp.bfloat16)
    target_bf = target.astype(jnp.bfloat16)
    out_bf = iou_loss(pred_bf, target_bf)
    jax.block_until_ready(out_bf)
    assert out_bf.dtype == jnp.bfloat16
    ref_bf = _iou_loss_ref(pred_bf.astype(jnp.float32), target_bf.astype(jnp.float32))
    np.testing.assert_allclose(
        np.asarray(out_bf.astype(jnp.float32)), np.asarray(ref_bf), rtol=2e-2, atol=2e-2
    )

    print("KERNEL_OK")
</pallas_src>

<mosaic_0001>
module attributes {stable_mosaic.version = 11 : i64} {
  func.func @_iou_loss_kernel(%arg0: i32, %arg1: memref<8x2048xf32, #tpu.memory_space<vmem>>, %arg2: memref<8x2048xf32, #tpu.memory_space<vmem>>, %arg3: memref<8x2048xf32, #tpu.memory_space<vmem>>) attributes {dimension_semantics = [#tpu.dimension_semantics<parallel>], iteration_bounds = array<i64: 1>, scalar_prefetch = 0 : i64, scratch_operands = 0 : i64, tpu.core_type = #tpu.core_type<tc>, window_params = [{transform_indices = @transform_0, window_bounds = array<i64: 8, 2048>}, {transform_indices = @transform_1, window_bounds = array<i64: 8, 2048>}, {transform_indices = @transform_2, window_bounds = array<i64: 8, 2048>}]} {
    %c0 = arith.constant 0 : index
    %c0_0 = arith.constant 0 : index
    %0 = vector.load %arg1[%c0, %c0_0] : memref<8x2048xf32, #tpu.memory_space<vmem>>, vector<8x2048xf32>
    %c0_1 = arith.constant 0 : index
    %c0_2 = arith.constant 0 : index
    %1 = vector.load %arg2[%c0_1, %c0_2] : memref<8x2048xf32, #tpu.memory_space<vmem>>, vector<8x2048xf32>
    %2 = arith.minimumf %0, %1 : vector<8x2048xf32>
    %c2_i32 = arith.constant 2 : i32
    %3 = tpu.dynamic_rotate %2 by %c2_i32 dim 1 : vector<8x2048xf32>, i32 -> vector<8x2048xf32>
    %4 = arith.addf %2, %3 : vector<8x2048xf32>
    %c1_i32 = arith.constant 1 : i32
    %5 = tpu.dynamic_rotate %4 by %c1_i32 dim 1 : vector<8x2048xf32>, i32 -> vector<8x2048xf32>
    %6 = arith.mulf %4, %5 : vector<8x2048xf32>
    %c2_i32_3 = arith.constant 2 : i32
    %7 = tpu.dynamic_rotate %0 by %c2_i32_3 dim 1 : vector<8x2048xf32>, i32 -> vector<8x2048xf32>
    %8 = arith.addf %0, %7 : vector<8x2048xf32>
    %c1_i32_4 = arith.constant 1 : i32
    %9 = tpu.dynamic_rotate %8 by %c1_i32_4 dim 1 : vector<8x2048xf32>, i32 -> vector<8x2048xf32>
    %10 = arith.mulf %8, %9 : vector<8x2048xf32>
    %c2_i32_5 = arith.constant 2 : i32
    %11 = tpu.dynamic_rotate %1 by %c2_i32_5 dim 1 : vector<8x2048xf32>, i32 -> vector<8x2048xf32>
    %12 = arith.addf %1, %11 : vector<8x2048xf32>
    %c1_i32_6 = arith.constant 1 : i32
    %13 = tpu.dynamic_rotate %12 by %c1_i32_6 dim 1 : vector<8x2048xf32>, i32 -> vector<8x2048xf32>
    %14 = arith.mulf %12, %13 : vector<8x2048xf32>
    %15 = arith.addf %10, %14 : vector<8x2048xf32>
    %16 = arith.subf %15, %6 : vector<8x2048xf32>
    %cst = arith.constant 9.99999997E-7 : f32
    %17 = vector.broadcast %cst : f32 to vector<8x2048xf32>
    %18 = arith.addf %16, %17 : vector<8x2048xf32>
    %19 = math.log %18 : vector<8x2048xf32>
    %20 = math.log %6 : vector<8x2048xf32>
    %21 = arith.subf %19, %20 : vector<8x2048xf32>
    %c0_7 = arith.constant 0 : index
    %c0_8 = arith.constant 0 : index
    %22 = vector.load %arg3[%c0_7, %c0_8] : memref<8x2048xf32, #tpu.memory_space<vmem>>, vector<8x2048xf32>
    tpu.vector_store %arg3[%c0_7, %c0_8], %21 {strides = array<i32>} : memref<8x2048xf32, #tpu.memory_space<vmem>>, vector<8x2048xf32>,
    return
  }
  func.func @transform_0(%arg0: i32) -> (i32, i32) {
    %c0_i32 = arith.constant 0 : i32
    %c0_i32_0 = arith.constant 0 : i32
    return %arg0, %c0_i32 : i32, i32
  }
  func.func @transform_1(%arg0: i32) -> (i32, i32) {
    %c0_i32 = arith.constant 0 : i32
    %c0_i32_0 = arith.constant 0 : i32
    return %arg0, %c0_i32 : i32, i32
  }
  func.func @transform_2(%arg0: i32) -> (i32, i32) {
    %c0_i32 = arith.constant 0 : i32
    %c0_i32_0 = arith.constant 0 : i32
    return %arg0, %c0_i32 : i32, i32
  }
}

</mosaic_0001>

<llo_original>
// kernel: iou_loss.1
$region0: #{iou_loss.1}
  #allocation0 [shape = 'u32[]', space=smem, size = 0x4, offset = 0x4, fixed_abs, tag = 'smem constant byte address 0x4 - core index']
  #allocation1 [shape = 'u32[144,128]{1,0:T(1,128)}', space=vmem, size = 0x12000, scoped, tag = 'internal scratch']
  %s0 = inlined_call_operand.vmem [shape: f32[8,2048], index: 0, kind: input, shape index: {}]
  %s1 = inlined_call_operand.vmem [shape: f32[8,2048], index: 1, kind: input, shape index: {}]
  %s2 = inlined_call_operand.vmem [shape: f32[8,2048], index: 2, kind: output, shape index: {}]
  %s3 = sld [smem:[#allocation0]]
  $region18: #{iou_loss.1} parent=0
    _
  %s5 = ssub.s32 1, %s3
  %s6 = scalar_select 0, %s5, %s3
  // Predicated region
  $region2: #{iou_loss.1} parent=0 // pred_check
    _
  $region3: #{iou_loss.1} parent=0 // pred_check_branch
    %8 = sbr.rel (0) target = $region5
  $region4: #{iou_loss.1} parent=0 // pred_region
    _
  $region5: #{iou_loss.1} parent=0 // pred_fallthru
    _
  // Predicated region
  $region6: #{iou_loss.1} parent=0 // pred_check
    _
  $region7: #{iou_loss.1} parent=0 // pred_check_branch
    %10 = sbr.rel (0) target = $region9
  $region8: #{iou_loss.1} parent=0 // pred_region
    _
  $region9: #{iou_loss.1} parent=0 // pred_fallthru
    _
  %v11 = vld [vmem:[%s0] sm:$0xff]
  %v12 = vld [vmem:[%s0 + $0x8] sm:$0xff]
  %v13 = vld [vmem:[%s0 + $0x10] sm:$0xff]
  %v14 = vld [vmem:[%s0 + $0x18] sm:$0xff]
  %v15 = vld [vmem:[%s0 + $0x20] sm:$0xff]
  %v16 = vld [vmem:[%s0 + $0x28] sm:$0xff]
  %v17 = vld [vmem:[%s0 + $0x30] sm:$0xff]
  %v18 = vld [vmem:[%s0 + $0x38] sm:$0xff]
  %v19 = vld [vmem:[%s0 + $0x40] sm:$0xff]
  %v20 = vld [vmem:[%s0 + $0x48] sm:$0xff]
  %v21 = vld [vmem:[%s0 + $0x50] sm:$0xff]
  %v22 = vld [vmem:[%s0 + $0x58] sm:$0xff]
  %v23 = vld [vmem:[%s0 + $0x60] sm:$0xff]
  %v24 = vld [vmem:[%s0 + $0x68] sm:$0xff]
  %v25 = vld [vmem:[%s0 + $0x70] sm:$0xff]
  %v26 = vld [vmem:[%s0 + $0x78] sm:$0xff]
  %v27 = vld [vmem:[%s1] sm:$0xff]
  %v28 = vld [vmem:[%s1 + $0x8] sm:$0xff]
  %v29 = vld [vmem:[%s1 + $0x10] sm:$0xff]
  %v30 = vld [vmem:[%s1 + $0x18] sm:$0xff]
  %v31 = vld [vmem:[%s1 + $0x20] sm:$0xff]
  %v32 = vld [vmem:[%s1 + $0x28] sm:$0xff]
  %v33 = vld [vmem:[%s1 + $0x30] sm:$0xff]
  %v34 = vld [vmem:[%s1 + $0x38] sm:$0xff]
  %v35 = vld [vmem:[%s1 + $0x40] sm:$0xff]
  %v36 = vld [vmem:[%s1 + $0x48] sm:$0xff]
  %v37 = vld [vmem:[%s1 + $0x50] sm:$0xff]
  %v38 = vld [vmem:[%s1 + $0x58] sm:$0xff]
  %v39 = vld [vmem:[%s1 + $0x60] sm:$0xff]
  %v40 = vld [vmem:[%s1 + $0x68] sm:$0xff]
  %v41 = vld [vmem:[%s1 + $0x70] sm:$0xff]
  %v42 = vld [vmem:[%s1 + $0x78] sm:$0xff]
  %v43 = vmin.f32 %v11, %v27
  %v44 = vmin.f32 %v12, %v28
  %v45 = vmin.f32 %v13, %v29
  %v46 = vmin.f32 %v14, %v30
  %v47 = vmin.f32 %v15, %v31
  %v48 = vmin.f32 %v16, %v32
  %v49 = vmin.f32 %v17, %v33
  %v50 = vmin.f32 %v18, %v34
  %v51 = vmin.f32 %v19, %v35
  %v52 = vmin.f32 %v20, %v36
  %v53 = vmin.f32 %v21, %v37
  %v54 = vmin.f32 %v22, %v38
  %v55 = vmin.f32 %v23, %v39
  %v56 = vmin.f32 %v24, %v40
  %v57 = vmin.f32 %v25, %v41
  %v58 = vmin.f32 %v26, %v42
  %59 = vrot.lane.b32.xlu0 %v43, 2
  %v60 = vpop.permute.xlu0 %59
  %61 = vrot.lane.b32.xlu0 %v44, 2
  %v62 = vpop.permute.xlu0 %61
  %63 = vrot.lane.b32.xlu0 %v45, 2
  %v64 = vpop.permute.xlu0 %63
  %65 = vrot.lane.b32.xlu0 %v46, 2
  %v66 = vpop.permute.xlu0 %65
  %67 = vrot.lane.b32.xlu0 %v47, 2
  %v68 = vpop.permute.xlu0 %67
  %69 = vrot.lane.b32.xlu0 %v48, 2
  %v70 = vpop.permute.xlu0 %69
  %71 = vrot.lane.b32.xlu0 %v49, 2
  %v72 = vpop.permute.xlu0 %71
  %73 = vrot.lane.b32.xlu0 %v50, 2
  %v74 = vpop.permute.xlu0 %73
  %75 = vrot.lane.b32.xlu0 %v51, 2
  %v76 = vpop.permute.xlu0 %75
  %77 = vrot.lane.b32.xlu0 %v52, 2
  %v78 = vpop.permute.xlu0 %77
  %79 = vrot.lane.b32.xlu0 %v53, 2
  %v80 = vpop.permute.xlu0 %79
  %81 = vrot.lane.b32.xlu0 %v54, 2
  %v82 = vpop.permute.xlu0 %81
  %83 = vrot.lane.b32.xlu0 %v55, 2
  %v84 = vpop.permute.xlu0 %83
  %85 = vrot.lane.b32.xlu0 %v56, 2
  %v86 = vpop.permute.xlu0 %85
  %87 = vrot.lane.b32.xlu0 %v57, 2
  %v88 = vpop.permute.xlu0 %87
  %89 = vrot.lane.b32.xlu0 %v58, 2
  %v90 = vpop.permute.xlu0 %89
  %v91 = vlaneseq
  %v92 = vand.u32 %v91, 127
  %vm93 = vcmp.lt.s32.totalorder %v92, 2
  %v94 = vsel %vm93, %v88, %v90
  %v95 = vsel %vm93, %v86, %v88
  %v96 = vsel %vm93, %v84, %v86
  %v97 = vsel %vm93, %v82, %v84
  %v98 = vsel %vm93, %v80, %v82
  %v99 = vsel %vm93, %v78, %v80
  %v100 = vsel %vm93, %v76, %v78
  %v101 = vsel %vm93, %v74, %v76
  %v102 = vsel %vm93, %v72, %v74
  %v103 = vsel %vm93, %v70, %v72
  %v104 = vsel %vm93, %v68, %v70
  %v105 = vsel %vm93, %v66, %v68
  %v106 = vsel %vm93, %v64, %v66
  %v107 = vsel %vm93, %v62, %v64
  %v108 = vsel %vm93, %v60, %v62
  %v109 = vsel %vm93, %v90, %v60
  %v110 = vadd.f32 %v43, %v109
  %v111 = vadd.f32 %v44, %v108
  %v112 = vadd.f32 %v45, %v107
  %v113 = vadd.f32 %v46, %v106
  %v114 = vadd.f32 %v47, %v105
  %v115 = vadd.f32 %v48, %v104
  %v116 = vadd.f32 %v49, %v103
  %v117 = vadd.f32 %v50, %v102
  %v118 = vadd.f32 %v51, %v101
  %v119 = vadd.f32 %v52, %v100
  %v120 = vadd.f32 %v53, %v99
  %v121 = vadd.f32 %v54, %v98
  %v122 = vadd.f32 %v55, %v97
  %v123 = vadd.f32 %v56, %v96
  %v124 = vadd.f32 %v57, %v95
  %v125 = vadd.f32 %v58, %v94
  %126 = vrot.lane.b32.xlu0 %v110, 1
  %v127 = vpop.permute.xlu0 %126
  %128 = vrot.lane.b32.xlu0 %v111, 1
  %v129 = vpop.permute.xlu0 %128
  %130 = vrot.lane.b32.xlu0 %v112, 1
  %v131 = vpop.permute.xlu0 %130
  %132 = vrot.lane.b32.xlu0 %v113, 1
  %v133 = vpop.permute.xlu0 %132
  %134 = vrot.lane.b32.xlu0 %v114, 1
  %v135 = vpop.permute.xlu0 %134
  %136 = vrot.lane.b32.xlu0 %v115, 1
  %v137 = vpop.permute.xlu0 %136
  %138 = vrot.lane.b32.xlu0 %v116, 1
  %v139 = vpop.permute.xlu0 %138
  %140 = vrot.lane.b32.xlu0 %v117, 1
  %v141 = vpop.permute.xlu0 %140
  %142 = vrot.lane.b32.xlu0 %v118, 1
  %v143 = vpop.permute.xlu0 %142
  %144 = vrot.lane.b32.xlu0 %v119, 1
  %v145 = vpop.permute.xlu0 %144
  %146 = vrot.lane.b32.xlu0 %v120, 1
  %v147 = vpop.permute.xlu0 %146
  %148 = vrot.lane.b32.xlu0 %v121, 1
  %v149 = vpop.permute.xlu0 %148
  %150 = vrot.lane.b32.xlu0 %v122, 1
  %v151 = vpop.permute.xlu0 %150
  %152 = vrot.lane.b32.xlu0 %v123, 1
  %v153 = vpop.permute.xlu0 %152
  %154 = vrot.lane.b32.xlu0 %v124, 1
  %v155 = vpop.permute.xlu0 %154
  %156 = vrot.lane.b32.xlu0 %v125, 1
  %v157 = vpop.permute.xlu0 %156
  %vm158 = vcmp.lt.s32.totalorder %v92, 1
  %v159 = vsel %vm158, %v155, %v157
  %v160 = vsel %vm158, %v153, %v155
  %v161 = vsel %vm158, %v151, %v153
  %v162 = vsel %vm158, %v149, %v151
  %v163 = vsel %vm158, %v147, %v149
  %v164 = vsel %vm158, %v145, %v147
  %v165 = vsel %vm158, %v143, %v145
  %v166 = vsel %vm158, %v141, %v143
  %v167 = vsel %vm158, %v139, %v141
  %v168 = vsel %vm158, %v137, %v139
  %v169 = vsel %vm158, %v135, %v137
  %v170 = vsel %vm158, %v133, %v135
  %v171 = vsel %vm158, %v131, %v133
  %v172 = vsel %vm158, %v129, %v131
  %v173 = vsel %vm158, %v127, %v129
  %v174 = vsel %vm158, %v157, %v127
  %v175 = vmul.f32 %v110, %v174
  %v176 = vmul.f32 %v111, %v173
  %v177 = vmul.f32 %v112, %v172
  %v178 = vmul.f32 %v113, %v171
  %v179 = vmul.f32 %v114, %v170
  %v180 = vmul.f32 %v115, %v169
  %v181 = vmul.f32 %v116, %v168
  %v182 = vmul.f32 %v117, %v167
  %v183 = vmul.f32 %v118, %v166
  %v184 = vmul.f32 %v119, %v165
  %v185 = vmul.f32 %v120, %v164
  %v186 = vmul.f32 %v121, %v163
  %v187 = vmul.f32 %v122, %v162
  %v188 = vmul.f32 %v123, %v161
  %v189 = vmul.f32 %v124, %v160
  %v190 = vmul.f32 %v125, %v159
  %191 = vrot.lane.b32.xlu0 %v11, 2
  %v192 = vpop.permute.xlu0 %191
  %193 = vrot.lane.b32.xlu0 %v12, 2
  %v194 = vpop.permute.xlu0 %193
  %195 = vrot.lane.b32.xlu0 %v13, 2
  %v196 = vpop.permute.xlu0 %195
  %197 = vrot.lane.b32.xlu0 %v14, 2
  %v198 = vpop.permute.xlu0 %197
  %199 = vrot.lane.b32.xlu0 %v15, 2
  %v200 = vpop.permute.xlu0 %199
  %201 = vrot.lane.b32.xlu0 %v16, 2
  %v202 = vpop.permute.xlu0 %201
  %203 = vrot.lane.b32.xlu0 %v17, 2
  %v204 = vpop.permute.xlu0 %203
  %205 = vrot.lane.b32.xlu0 %v18, 2
  %v206 = vpop.permute.xlu0 %205
  %207 = vrot.lane.b32.xlu0 %v19, 2
  %v208 = vpop.permute.xlu0 %207
  %209 = vrot.lane.b32.xlu0 %v20, 2
  %v210 = vpop.permute.xlu0 %209
  %211 = vrot.lane.b32.xlu0 %v21, 2
  %v212 = vpop.permute.xlu0 %211
  %213 = vrot.lane.b32.xlu0 %v22, 2
  %v214 = vpop.permute.xlu0 %213
  %215 = vrot.lane.b32.xlu0 %v23, 2
  %v216 = vpop.permute.xlu0 %215
  %217 = vrot.lane.b32.xlu0 %v24, 2
  %v218 = vpop.permute.xlu0 %217
  %219 = vrot.lane.b32.xlu0 %v25, 2
  %v220 = vpop.permute.xlu0 %219
  %221 = vrot.lane.b32.xlu0 %v26, 2
  %v222 = vpop.permute.xlu0 %221
  %v223 = vsel %vm93, %v220, %v222
  %v224 = vsel %vm93, %v218, %v220
  %v225 = vsel %vm93, %v216, %v218
  %v226 = vsel %vm93, %v214, %v216
  %v227 = vsel %vm93, %v212, %v214
  %v228 = vsel %vm93, %v210, %v212
  %v229 = vsel %vm93, %v208, %v210
  %v230 = vsel %vm93, %v206, %v208
  %v231 = vsel %vm93, %v204, %v206
  %v232 = vsel %vm93, %v202, %v204
  %v233 = vsel %vm93, %v200, %v202
  %v234 = vsel %vm93, %v198, %v200
  %v235 = vsel %vm93, %v196, %v198
  %v236 = vsel %vm93, %v194, %v196
  %v237 = vsel %vm93, %v192, %v194
  %v238 = vsel %vm93, %v222, %v192
  %v239 = vadd.f32 %v11, %v238
  %v240 = vadd.f32 %v12, %v237
  %v241 = vadd.f32 %v13, %v236
  %v242 = vadd.f32 %v14, %v235
  %v243 = vadd.f32 %v15, %v234
  %v244 = vadd.f32 %v16, %v233
  %v245 = vadd.f32 %v17, %v232
  %v246 = vadd.f32 %v18, %v231
  %v247 = vadd.f32 %v19, %v230
  %v248 = vadd.f32 %v20, %v229
  %v249 = vadd.f32 %v21, %v228
  %v250 = vadd.f32 %v22, %v227
  %v251 = vadd.f32 %v23, %v226
  %v252 = vadd.f32 %v24, %v225
  %v253 = vadd.f32 %v25, %v224
  %v254 = vadd.f32 %v26, %v223
  %255 = vrot.lane.b32.xlu0 %v239, 1
  %v256 = vpop.permute.xlu0 %255
  %257 = vrot.lane.b32.xlu0 %v240, 1
  %v258 = vpop.permute.xlu0 %257
  %259 = vrot.lane.b32.xlu0 %v241, 1
  %v260 = vpop.permute.xlu0 %259
  %261 = vrot.lane.b32.xlu0 %v242, 1
  %v262 = vpop.permute.xlu0 %261
  %263 = vrot.lane.b32.xlu0 %v243, 1
  %v264 = vpop.permute.xlu0 %263
  %265 = vrot.lane.b32.xlu0 %v244, 1
  %v266 = vpop.permute.xlu0 %265
  %267 = vrot.lane.b32.xlu0 %v245, 1
  %v268 = vpop.permute.xlu0 %267
  %269 = vrot.lane.b32.xlu0 %v246, 1
  %v270 = vpop.permute.xlu0 %269
  %271 = vrot.lane.b32.xlu0 %v247, 1
  %v272 = vpop.permute.xlu0 %271
  %273 = vrot.lane.b32.xlu0 %v248, 1
  %v274 = vpop.permute.xlu0 %273
  %275 = vrot.lane.b32.xlu0 %v249, 1
  %v276 = vpop.permute.xlu0 %275
  %277 = vrot.lane.b32.xlu0 %v250, 1
  %v278 = vpop.permute.xlu0 %277
  %279 = vrot.lane.b32.xlu0 %v251, 1
  %v280 = vpop.permute.xlu0 %279
  %281 = vrot.lane.b32.xlu0 %v252, 1
  %v282 = vpop.permute.xlu0 %281
  %283 = vrot.lane.b32.xlu0 %v253, 1
  %v284 = vpop.permute.xlu0 %283
  %285 = vrot.lane.b32.xlu0 %v254, 1
  %v286 = vpop.permute.xlu0 %285
  %v287 = vsel %vm158, %v284, %v286
  %v288 = vsel %vm158, %v282, %v284
  %v289 = vsel %vm158, %v280, %v282
  %v290 = vsel %vm158, %v278, %v280
  %v291 = vsel %vm158, %v276, %v278
  %v292 = vsel %vm158, %v274, %v276
  %v293 = vsel %vm158, %v272, %v274
  %v294 = vsel %vm158, %v270, %v272
  %v295 = vsel %vm158, %v268, %v270
  %v296 = vsel %vm158, %v266, %v268
  %v297 = vsel %vm158, %v264, %v266
  %v298 = vsel %vm158, %v262, %v264
  %v299 = vsel %vm158, %v260, %v262
  %v300 = vsel %vm158, %v258, %v260
  %v301 = vsel %vm158, %v256, %v258
  %v302 = vsel %vm158, %v286, %v256
  %v303 = vmul.f32 %v239, %v302
  %v304 = vmul.f32 %v240, %v301
  %v305 = vmul.f32 %v241, %v300
  %v306 = vmul.f32 %v242, %v299
  %v307 = vmul.f32 %v243, %v298
  %v308 = vmul.f32 %v244, %v297
  %v309 = vmul.f32 %v245, %v296
  %v310 = vmul.f32 %v246, %v295
  %v311 = vmul.f32 %v247, %v294
  %v312 = vmul.f32 %v248, %v293
  %v313 = vmul.f32 %v249, %v292
  %v314 = vmul.f32 %v250, %v291
  %v315 = vmul.f32 %v251, %v290
  %v316 = vmul.f32 %v252, %v289
  %v317 = vmul.f32 %v253, %v288
  %v318 = vmul.f32 %v254, %v287
  %319 = vrot.lane.b32.xlu0 %v27, 2
  %v320 = vpop.permute.xlu0 %319
  %321 = vrot.lane.b32.xlu0 %v28, 2
  %v322 = vpop.permute.xlu0 %321
  %323 = vrot.lane.b32.xlu0 %v29, 2
  %v324 = vpop.permute.xlu0 %323
  %325 = vrot.lane.b32.xlu0 %v30, 2
  %v326 = vpop.permute.xlu0 %325
  %327 = vrot.lane.b32.xlu0 %v31, 2
  %v328 = vpop.permute.xlu0 %327
  %329 = vrot.lane.b32.xlu0 %v32, 2
  %v330 = vpop.permute.xlu0 %329
  %331 = vrot.lane.b32.xlu0 %v33, 2
  %v332 = vpop.permute.xlu0 %331
  %333 = vrot.lane.b32.xlu0 %v34, 2
  %v334 = vpop.permute.xlu0 %333
  %335 = vrot.lane.b32.xlu0 %v35, 2
  %v336 = vpop.permute.xlu0 %335
  %337 = vrot.lane.b32.xlu0 %v36, 2
  %v338 = vpop.permute.xlu0 %337
  %339 = vrot.lane.b32.xlu0 %v37, 2
  %v340 = vpop.permute.xlu0 %339
  %341 = vrot.lane.b32.xlu0 %v38, 2
  %v342 = vpop.permute.xlu0 %341
  %343 = vrot.lane.b32.xlu0 %v39, 2
  %v344 = vpop.permute.xlu0 %343
  %345 = vrot.lane.b32.xlu0 %v40, 2
  %v346 = vpop.permute.xlu0 %345
  %347 = vrot.lane.b32.xlu0 %v41, 2
  %v348 = vpop.permute.xlu0 %347
  %349 = vrot.lane.b32.xlu0 %v42, 2
  %v350 = vpop.permute.xlu0 %349
  %v351 = vsel %vm93, %v348, %v350
  %v352 = vsel %vm93, %v346, %v348
  %v353 = vsel %vm93, %v344, %v346
  %v354 = vsel %vm93, %v342, %v344
  %v355 = vsel %vm93, %v340, %v342
  %v356 = vsel %vm93, %v338, %v340
  %v357 = vsel %vm93, %v336, %v338
  %v358 = vsel %vm93, %v334, %v336
  %v359 = vsel %vm93, %v332, %v334
  %v360 = vsel %vm93, %v330, %v332
  %v361 = vsel %vm93, %v328, %v330
  %v362 = vsel %vm93, %v326, %v328
  %v363 = vsel %vm93, %v324, %v326
  %v364 = vsel %vm93, %v322, %v324
  %v365 = vsel %vm93, %v320, %v322
  %v366 = vsel %vm93, %v350, %v320
  %v367 = vadd.f32 %v27, %v366
  %v368 = vadd.f32 %v28, %v365
  %v369 = vadd.f32 %v29, %v364
  %v370 = vadd.f32 %v30, %v363
  %v371 = vadd.f32 %v31, %v362
  %v372 = vadd.f32 %v32, %v361
  %v373 = vadd.f32 %v33, %v360
  %v374 = vadd.f32 %v34, %v359
  %v375 = vadd.f32 %v35, %v358
  %v376 = vadd.f32 %v36, %v357
  %v377 = vadd.f32 %v37, %v356
  %v378 = vadd.f32 %v38, %v355
  %v379 = vadd.f32 %v39, %v354
  %v380 = vadd.f32 %v40, %v353
  %v381 = vadd.f32 %v41, %v352
  %v382 = vadd.f32 %v42, %v351
  %383 = vrot.lane.b32.xlu0 %v367, 1
  %v384 = vpop.permute.xlu0 %383
  %385 = vrot.lane.b32.xlu0 %v368, 1
  %v386 = vpop.permute.xlu0 %385
  %387 = vrot.lane.b32.xlu0 %v369, 1
  %v388 = vpop.permute.xlu0 %387
  %389 = vrot.lane.b32.xlu0 %v370, 1
  %v390 = vpop.permute.xlu0 %389
  %391 = vrot.lane.b32.xlu0 %v371, 1
  %v392 = vpop.permute.xlu0 %391
  %393 = vrot.lane.b32.xlu0 %v372, 1
  %v394 = vpop.permute.xlu0 %393
  %395 = vrot.lane.b32.xlu0 %v373, 1
  %v396 = vpop.permute.xlu0 %395
  %397 = vrot.lane.b32.xlu0 %v374, 1
  %v398 = vpop.permute.xlu0 %397
  %399 = vrot.lane.b32.xlu0 %v375, 1
  %v400 = vpop.permute.xlu0 %399
  %401 = vrot.lane.b32.xlu0 %v376, 1
  %v402 = vpop.permute.xlu0 %401
  %403 = vrot.lane.b32.xlu0 %v377, 1
  %v404 = vpop.permute.xlu0 %403
  %405 = vrot.lane.b32.xlu0 %v378, 1
  %v406 = vpop.permute.xlu0 %405
  %407 = vrot.lane.b32.xlu0 %v379, 1
  %v408 = vpop.permute.xlu0 %407
  %409 = vrot.lane.b32.xlu0 %v380, 1
  %v410 = vpop.permute.xlu0 %409
  %411 = vrot.lane.b32.xlu0 %v381, 1
  %v412 = vpop.permute.xlu0 %411
  %413 = vrot.lane.b32.xlu0 %v382, 1
  %v414 = vpop.permute.xlu0 %413
  %v415 = vsel %vm158, %v412, %v414
  %v416 = vsel %vm158, %v410, %v412
  %v417 = vsel %vm158, %v408, %v410
  %v418 = vsel %vm158, %v406, %v408
  %v419 = vsel %vm158, %v404, %v406
  %v420 = vsel %vm158, %v402, %v404
  %v421 = vsel %vm158, %v400, %v402
  %v422 = vsel %vm158, %v398, %v400
  %v423 = vsel %vm158, %v396, %v398
  %v424 = vsel %vm158, %v394, %v396
  %v425 = vsel %vm158, %v392, %v394
  %v426 = vsel %vm158, %v390, %v392
  %v427 = vsel %vm158, %v388, %v390
  %v428 = vsel %vm158, %v386, %v388
  %v429 = vsel %vm158, %v384, %v386
  %v430 = vsel %vm158, %v414, %v384
  %v431 = vmul.f32 %v367, %v430
  %v432 = vmul.f32 %v368, %v429
  %v433 = vmul.f32 %v369, %v428
  %v434 = vmul.f32 %v370, %v427
  %v435 = vmul.f32 %v371, %v426
  %v436 = vmul.f32 %v372, %v425
  %v437 = vmul.f32 %v373, %v424
  %v438 = vmul.f32 %v374, %v423
  %v439 = vmul.f32 %v375, %v422
  %v440 = vmul.f32 %v376, %v421
  %v441 = vmul.f32 %v377, %v420
  %v442 = vmul.f32 %v378, %v419
  %v443 = vmul.f32 %v379, %v418
  %v444 = vmul.f32 %v380, %v417
  %v445 = vmul.f32 %v381, %v416
  %v446 = vmul.f32 %v382, %v415
  %v447 = vadd.f32 %v303, %v431
  %v448 = vadd.f32 %v304, %v432
  %v449 = vadd.f32 %v305, %v433
  %v450 = vadd.f32 %v306, %v434
  %v451 = vadd.f32 %v307, %v435
  %v452 = vadd.f32 %v308, %v436
  %v453 = vadd.f32 %v309, %v437
  %v454 = vadd.f32 %v310, %v438
  %v455 = vadd.f32 %v311, %v439
  %v456 = vadd.f32 %v312, %v440
  %v457 = vadd.f32 %v313, %v441
  %v458 = vadd.f32 %v314, %v442
  %v459 = vadd.f32 %v315, %v443
  %v460 = vadd.f32 %v316, %v444
  %v461 = vadd.f32 %v317, %v445
  %v462 = vadd.f32 %v318, %v446
  %v463 = vsub.f32 %v447, %v175
  %v464 = vsub.f32 %v448, %v176
  %v465 = vsub.f32 %v449, %v177
  %v466 = vsub.f32 %v450, %v178
  %v467 = vsub.f32 %v451, %v179
  %v468 = vsub.f32 %v452, %v180
  %v469 = vsub.f32 %v453, %v181
  %v470 = vsub.f32 %v454, %v182
  %v471 = vsub.f32 %v455, %v183
  %v472 = vsub.f32 %v456, %v184
  %v473 = vsub.f32 %v457, %v185
  %v474 = vsub.f32 %v458, %v186
  %v475 = vsub.f32 %v459, %v187
  %v476 = vsub.f32 %v460, %v188
  %v477 = vsub.f32 %v461, %v189
  %v478 = vsub.f32 %v462, %v190
  %v479 = vadd.f32 %v463, 1e-06
  %v480 = vadd.f32 %v464, 1e-06
  %v481 = vadd.f32 %v465, 1e-06
  %v482 = vadd.f32 %v466, 1e-06
  %v483 = vadd.f32 %v467, 1e-06
  %v484 = vadd.f32 %v468, 1e-06
  %v485 = vadd.f32 %v469, 1e-06
  %v486 = vadd.f32 %v470, 1e-06
  %v487 = vadd.f32 %v471, 1e-06
  %v488 = vadd.f32 %v472, 1e-06
  %v489 = vadd.f32 %v473, 1e-06
  %v490 = vadd.f32 %v474, 1e-06
  %v491 = vadd.f32 %v475, 1e-06
  %v492 = vadd.f32 %v476, 1e-06
  %v493 = vadd.f32 %v477, 1e-06
  %v494 = vadd.f32 %v478, 1e-06
  %v495 = vlog2.pop %v479
  %v496 = vmul.f32 %v495, 0.6931472
  %v497 = vlog2.pop %v480
  %v498 = vmul.f32 %v497, 0.6931472
  %v499 = vlog2.pop %v481
  %v500 = vmul.f32 %v499, 0.6931472
  %v501 = vlog2.pop %v482
  %v502 = vmul.f32 %v501, 0.6931472
  %v503 = vlog2.pop %v483
  %v504 = vmul.f32 %v503, 0.6931472
  %v505 = vlog2.pop %v484
  %v506 = vmul.f32 %v505, 0.6931472
  %v507 = vlog2.pop %v485
  %v508 = vmul.f32 %v507, 0.6931472
  %v509 = vlog2.pop %v486
  %v510 = vmul.f32 %v509, 0.6931472
  %v511 = vlog2.pop %v487
  %v512 = vmul.f32 %v511, 0.6931472
  %v513 = vlog2.pop %v488
  %v514 = vmul.f32 %v513, 0.6931472
  %v515 = vlog2.pop %v489
  %v516 = vmul.f32 %v515, 0.6931472
  %v517 = vlog2.pop %v490
  %v518 = vmul.f32 %v517, 0.6931472
  %v519 = vlog2.pop %v491
  %v520 = vmul.f32 %v519, 0.6931472
  %v521 = vlog2.pop %v492
  %v522 = vmul.f32 %v521, 0.6931472
  %v523 = vlog2.pop %v493
  %v524 = vmul.f32 %v523, 0.6931472
  %v525 = vlog2.pop %v494
  %v526 = vmul.f32 %v525, 0.6931472
  %v527 = vlog2.pop %v175
  %v528 = vmul.f32 %v527, 0.6931472
  %v529 = vlog2.pop %v176
  %v530 = vmul.f32 %v529, 0.6931472
  %v531 = vlog2.pop %v177
  %v532 = vmul.f32 %v531, 0.6931472
  %v533 = vlog2.pop %v178
  %v534 = vmul.f32 %v533, 0.6931472
  %v535 = vlog2.pop %v179
  %v536 = vmul.f32 %v535, 0.6931472
  %v537 = vlog2.pop %v180
  %v538 = vmul.f32 %v537, 0.6931472
  %v539 = vlog2.pop %v181
  %v540 = vmul.f32 %v539, 0.6931472
  %v541 = vlog2.pop %v182
  %v542 = vmul.f32 %v541, 0.6931472
  %v543 = vlog2.pop %v183
  %v544 = vmul.f32 %v543, 0.6931472
  %v545 = vlog2.pop %v184
  %v546 = vmul.f32 %v545, 0.6931472
  %v547 = vlog2.pop %v185
  %v548 = vmul.f32 %v547, 0.6931472
  %v549 = vlog2.pop %v186
  %v550 = vmul.f32 %v549, 0.6931472
  %v551 = vlog2.pop %v187
  %v552 = vmul.f32 %v551, 0.6931472
  %v553 = vlog2.pop %v188
  %v554 = vmul.f32 %v553, 0.6931472
  %v555 = vlog2.pop %v189
  %v556 = vmul.f32 %v555, 0.6931472
  %v557 = vlog2.pop %v190
  %v558 = vmul.f32 %v557, 0.6931472
  %v559 = vsub.f32 %v496, %v528
  %v560 = vsub.f32 %v498, %v530
  %v561 = vsub.f32 %v500, %v532
  %v562 = vsub.f32 %v502, %v534
  %v563 = vsub.f32 %v504, %v536
  %v564 = vsub.f32 %v506, %v538
  %v565 = vsub.f32 %v508, %v540
  %v566 = vsub.f32 %v510, %v542
  %v567 = vsub.f32 %v512, %v544
  %v568 = vsub.f32 %v514, %v546
  %v569 = vsub.f32 %v516, %v548
  %v570 = vsub.f32 %v518, %v550
  %v571 = vsub.f32 %v520, %v552
  %v572 = vsub.f32 %v522, %v554
  %v573 = vsub.f32 %v524, %v556
  %v574 = vsub.f32 %v526, %v558
  %575 = vst [vmem:[%s2] sm:$0xff] %v559
  %576 = vst [vmem:[%s2 + $0x8] sm:$0xff] %v560
  %577 = vst [vmem:[%s2 + $0x10] sm:$0xff] %v561
  %578 = vst [vmem:[%s2 + $0x18] sm:$0xff] %v562
  %579 = vst [vmem:[%s2 + $0x20] sm:$0xff] %v563
  %580 = vst [vmem:[%s2 + $0x28] sm:$0xff] %v564
  %581 = vst [vmem:[%s2 + $0x30] sm:$0xff] %v565
  %582 = vst [vmem:[%s2 + $0x38] sm:$0xff] %v566
  %583 = vst [vmem:[%s2 + $0x40] sm:$0xff] %v567
  %584 = vst [vmem:[%s2 + $0x48] sm:$0xff] %v568
  %585 = vst [vmem:[%s2 + $0x50] sm:$0xff] %v569
  %586 = vst [vmem:[%s2 + $0x58] sm:$0xff] %v570
  %587 = vst [vmem:[%s2 + $0x60] sm:$0xff] %v571
  %588 = vst [vmem:[%s2 + $0x68] sm:$0xff] %v572
  %589 = vst [vmem:[%s2 + $0x70] sm:$0xff] %v573
  %590 = vst [vmem:[%s2 + $0x78] sm:$0xff] %v574
  // Predicated region
  $region10: #{iou_loss.1} parent=0 // pred_check
    _
  $region11: #{iou_loss.1} parent=0 // pred_check_branch
    %592 = sbr.rel (0) target = $region13
  $region12: #{iou_loss.1} parent=0 // pred_region
    _
  $region13: #{iou_loss.1} parent=0 // pred_fallthru
    _
  // Predicated region
  $region14: #{iou_loss.1} parent=0 // pred_check
    _
  $region15: #{iou_loss.1} parent=0 // pred_check_branch
    %594 = sbr.rel (0) target = $region17
  $region16: #{iou_loss.1} parent=0 // pred_region
    _
  $region17: #{iou_loss.1} parent=0 // pred_fallthru
    _

// kernel: squeeze.1
$region0: #{squeeze.1}
  %s0 = inlined_call_operand.vmem [shape: f32[2048], index: 0, kind: input, shape index: {}]
  %s1 = inlined_call_operand.hbm [shape: f32[2,32,32], index: 1, kind: output, shape index: {}]
  $region1: #{squeeze.1} parent=0
    #allocation0 [shape = 'u8[32768]{0}', space=vmem, size = 0x8000, scoped, tag = 'operand span for operand 1']
    #allocation1 [shape = 's32[1]{0}', space=sflag, size = 0x4, scoped, tag = 'scoped memory for squeeze.1']
    %2 = vsyncpa [#allocation1], 0
    %v3 = vld [vmem:[%s0] sm:$0xff]
    %vm4 = vcmask 261120
    %5 = vst.msk [vmem:[#allocation0] ss:$4 sm:$0xff] %vm4, %v3
    %s6 = scalar_lea.vmem %s0, 8
    %v7 = vld [vmem:[%s6] sm:$0xff]
    %vm8 = vcmask 261120
    %s9 = scalar_lea.vmem [#allocation0], 32
    %10 = vst.msk [vmem:[%s9] ss:$4 sm:$0xff] %vm8, %v7
    %v11 = vld [vmem:[%s0] sm:$0xff]
    %12 = vrot.lane.b32.xlu0 %v11, 96
    %v13 = vpop.permute.xlu0 %12
    %vm14 = vcmask 261120
    %s15 = scalar_lea.vmem [#allocation0], 1
    %16 = vst.msk [vmem:[%s15] ss:$4 sm:$0xff] %vm14, %v13
    %s17 = scalar_lea.vmem %s0, 8
    %v18 = vld [vmem:[%s17] sm:$0xff]
    %19 = vrot.lane.b32.xlu0 %v18, 96
    %v20 = vpop.permute.xlu0 %19
    %vm21 = vcmask 261120
    %s22 = scalar_lea.vmem [#allocation0], 33
    %23 = vst.msk [vmem:[%s22] ss:$4 sm:$0xff] %vm21, %v20
    %v24 = vld [vmem:[%s0] sm:$0xff]
    %25 = vrot.lane.b32.xlu0 %v24, 64
    %v26 = vpop.permute.xlu0 %25
    %vm27 = vcmask 261120
    %s28 = scalar_lea.vmem [#allocation0], 2
    %29 = vst.msk [vmem:[%s28] ss:$4 sm:$0xff] %vm27, %v26
    %s30 = scalar_lea.vmem %s0, 8
    %v31 = vld [vmem:[%s30] sm:$0xff]
    %32 = vrot.lane.b32.xlu0 %v31, 64
    %v33 = vpop.permute.xlu0 %32
    %vm34 = vcmask 261120
    %s35 = scalar_lea.vmem [#allocation0], 34
    %36 = vst.msk [vmem:[%s35] ss:$4 sm:$0xff] %vm34, %v33
    %v37 = vld [vmem:[%s0] sm:$0xff]
    %38 = vrot.lane.b32.xlu0 %v37, 32
    %v39 = vpop.permute.xlu0 %38
    %vm40 = vcmask 261120
    %s41 = scalar_lea.vmem [#allocation0], 3
    %42 = vst.msk [vmem:[%s41] ss:$4 sm:$0xff] %vm40, %v39
    %s43 = scalar_lea.vmem %s0, 8
    %v44 = vld [vmem:[%s43] sm:$0xff]
    %45 = vrot.lane.b32.xlu0 %v44, 32
    %v46 = vpop.permute.xlu0 %45
    %vm47 = vcmask 261120
    %s48 = scalar_lea.vmem [#allocation0], 35
    %49 = vst.msk [vmem:[%s48] ss:$4 sm:$0xff] %vm47, %v46
    %s51 = ssub.s32 1024, 1024
    %52 = vsyncadd [#allocation1], %s51
    %s54 = sshll.u32 [#allocation0], 4
    %s55 = int_to_ptr.vmem [resolvable:$true] %s54
    %57 = dma.vmem_to_hbm [thread:$0]  %s55, 1024, %s1, [#allocation1]
    %58 = dma.done [#allocation1], 1024
    %59 = vsyncpa [#allocation1], 1

</llo_original>
